<compile_context>
chip_gen: v7x
topology: tpu7x:2x2x1
jax: 0.10.0
libtpu: 0.0.40
codegen_flags: <defaults>
</compile_context>

<pallas_src>
import functools

import jax
import jax.numpy as jnp
from jax.experimental import pallas as pl
from jax.experimental.pallas import tpu as pltpu


LANE = 128


def _round_up(x, m):
    return ((x + m - 1) // m) * m


def _sublane_multiple(itemsize):
    # packed sublane granularity: f32 -> 8, bf16 -> 16, int8/fp8 -> 32
    return {1: 32, 2: 16}.get(itemsize, 8)


def _vmem_limit_bytes():
    cap = None
    try:
        info = pltpu.get_tpu_info()
        cap = getattr(info, "vmem_capacity_bytes", None)
    except Exception:
        cap = None
    if not cap:
        cap = 64 * 1024 * 1024  # conservative: v7x per-TensorCore physical VMEM
    # leave headroom for compiler temporaries / semaphores; never ask > 100 MiB
    return int(min(cap * 3 // 4, 100 * 1024 * 1024))


# --------------------------------------------------------------------------
# Fused path: all layers in one pallas_call, weights resident in VMEM.
# --------------------------------------------------------------------------

def _fused_mlp_kernel(x_ref, *refs, num_layers, sigmoid_output):
    """x_ref: (TILE_M, F_in); refs = w_0, b_0, ..., w_{L-1}, b_{L-1}, o_ref."""
    o_ref = refs[-1]
    h = x_ref[...]                                   # native dtype into MXU
    for i in range(num_layers):
        w = refs[2 * i][...]                         # (K, N_pad), pre-transposed
        b = refs[2 * i + 1][...]                     # (1, N_pad)
        y = jax.lax.dot_general(
            h, w,
            dimension_numbers=(((1,), (0,)), ((), ())),
            preferred_element_type=jnp.float32,      # f32 accumulation on MXU
        )
        y = y + b.astype(jnp.float32)                # f32 epilogue
        if i < num_layers - 1:
            y = jnp.maximum(y, 0.0)
            h = y.astype(x_ref.dtype)                # native dtype for next layer
        else:
            if sigmoid_output:
                y = jax.nn.sigmoid(y)
            o_ref[...] = y.astype(o_ref.dtype)


def _choose_tile_m(m_rows, f_in, f_out_pad, max_width_pad, in_itemsize,
                   weight_bytes, vmem_limit):
    mult = _sublane_multiple(in_itemsize)
    if m_rows <= mult:
        return m_rows                                # block = full (legal) dim
    # resident weights/biases are double-buffered by default pipelining
    resident = 2 * weight_bytes
    per_row = 2 * f_in * in_itemsize                 # x tile, 2 pipeline buffers
    per_row += 2 * f_out_pad * in_itemsize           # out tile, 2 pipeline buffers
    per_row += 4 * (max_width_pad + f_out_pad)       # f32 intermediates live at once
    per_row += in_itemsize * max_width_pad           # down-cast copy of h
    avail = vmem_limit - resident - (2 << 20)        # 2 MiB compiler headroom
    cap = 2048                                       # amortize ~0.35us/grid-step
    tile = min(m_rows, cap, max(mult, avail // per_row))
    # guarantee >= 2 row tiles so v7x's second TensorCore gets work
    half = _round_up(-(-m_rows // 2), mult)
    tile = min(tile, half)
    tile = max(mult, (int(tile) // mult) * mult)
    return int(tile)


def _mlp_fused(x2d, weights_p, biases_p, sigmoid_output, vmem_limit, weight_bytes):
    M, f_in = x2d.shape
    num_layers = len(weights_p)
    f_out_pad = weights_p[-1].shape[1]
    max_width_pad = max(w.shape[1] for w in weights_p)
    isz = jnp.dtype(x2d.dtype).itemsize

    tile_m = _choose_tile_m(M, f_in, f_out_pad, max_width_pad, isz,
                            weight_bytes, vmem_limit)
    grid = (pl.cdiv(M, tile_m),)                     # no jnp.pad of x; partial
                                                     # last block is masked

    in_specs = [pl.BlockSpec((tile_m, f_in), lambda i: (i, 0))]
    flat_wb = []
    for w, b in zip(weights_p, biases_p):
        # Full-array blocks, same block index every step -> weights stay
        # resident in VMEM across the whole row sweep.
        in_specs.append(pl.BlockSpec(w.shape, lambda i: (0, 0)))
        in_specs.append(pl.BlockSpec((1, w.shape[1]), lambda i: (0, 0)))
        flat_wb.append(w)
        flat_wb.append(b.reshape(1, -1))

    kernel = functools.partial(_fused_mlp_kernel,
                               num_layers=num_layers,
                               sigmoid_output=sigmoid_output)

    flops = 2 * M * sum(int(w.shape[0]) * int(w.shape[1]) for w in weights_p)
    bytes_accessed = (int(x2d.size) * isz
                      + sum(int(w.size) * isz for w in weights_p)
                      + sum(int(b.size) * isz for b in biases_p)
                      + M * f_out_pad * isz)
    transcendentals = M * f_out_pad if sigmoid_output else 0

    return pl.pallas_call(
        kernel,
        out_shape=jax.ShapeDtypeStruct((M, f_out_pad), x2d.dtype),
        grid=grid,
        in_specs=in_specs,
        out_specs=pl.BlockSpec((tile_m, f_out_pad), lambda i: (i, 0)),
        compiler_params=pltpu.CompilerParams(
            dimension_semantics=("parallel",),       # v7x: split row tiles over 2 TCs
            vmem_limit_bytes=vmem_limit),
        cost_estimate=pl.CostEstimate(flops=flops,
                                      transcendentals=transcendentals,
                                      bytes_accessed=bytes_accessed),
    )(x2d, *flat_wb)


# --------------------------------------------------------------------------
# Fallback path: per-layer matmul tiled over (M, N) — used when resident
# weights would not fit comfortably in VMEM (e.g. hidden_dim >= 4096 f32).
# --------------------------------------------------------------------------

def _linear_kernel(x_ref, w_ref, b_ref, o_ref, *, relu, sigmoid):
    y = jax.lax.dot_general(
        x_ref[...], w_ref[...],
        dimension_numbers=(((1,), (0,)), ((), ())),
        preferred_element_type=jnp.float32)
    y = y + b_ref[...].astype(jnp.float32)
    if relu:
        y = jnp.maximum(y, 0.0)
    if sigmoid:
        y = jax.nn.sigmoid(y)
    o_ref[...] = y.astype(o_ref.dtype)


def _linear_pallas(x2d, w, b2d, *, relu, sigmoid, vmem_limit):
    M, K = x2d.shape
    _, N = w.shape                                   # N is a multiple of 128
    isz = jnp.dtype(x2d.dtype).itemsize
    mult = _sublane_multiple(isz)

    budget = int(vmem_limit * 0.8)
    tn = min(N, 512)
    w_cost = 2 * (K * tn + tn) * isz                 # double-buffered w + b tiles
    per_row = 2 * K * isz + 2 * tn * isz + 4 * tn
    avail = budget - w_cost
    if avail <= per_row * mult:
        # TODO(synk): extreme K would need a K-reduction grid; shrink tn instead.
        tn = 128
        w_cost = 2 * (K * tn + tn) * isz
        per_row = 2 * K * isz + 2 * tn * isz + 4 * tn
        avail = budget - w_cost

    if M <= mult:
        tm = M
    else:
        tm = min(1024, max(mult, avail // per_row), _round_up(M, mult))
        tm = max(mult, (int(tm) // mult) * mult)

    grid = (pl.cdiv(M, tm), pl.cdiv(N, tn))
    kernel = functools.partial(_linear_kernel, relu=relu, sigmoid=sigmoid)
    return pl.pallas_call(
        kernel,
        out_shape=jax.ShapeDtypeStruct((M, N), x2d.dtype),
        grid=grid,
        in_specs=[pl.BlockSpec((tm, K), lambda i, j: (i, 0)),
                  pl.BlockSpec((K, tn), lambda i, j: (0, j)),
                  pl.BlockSpec((1, tn), lambda i, j: (0, j))],
        out_specs=pl.BlockSpec((tm, tn), lambda i, j: (i, j)),
        compiler_params=pltpu.CompilerParams(
            dimension_semantics=("parallel", "parallel"),
            vmem_limit_bytes=vmem_limit),
    )(x2d, w, b2d)


def _mlp_per_layer(x2d, weights_p, biases_p, sigmoid_output, vmem_limit):
    n_layers = len(weights_p)
    h = x2d
    for i, (w, b) in enumerate(zip(weights_p, biases_p)):
        last = i == n_layers - 1
        h = _linear_pallas(h, w, b.reshape(1, -1),
                           relu=not last,
                           sigmoid=(last and sigmoid_output),
                           vmem_limit=vmem_limit)
    return h


# --------------------------------------------------------------------------
# Dispatcher + module wrapper
# --------------------------------------------------------------------------

def mlp_forward_pallas(x2d, weights_p, biases_p, sigmoid_output,
                       force_per_layer=False):
    vmem_limit = _vmem_limit_bytes()
    weight_bytes = sum(int(w.size) * w.dtype.itemsize for w in weights_p)
    weight_bytes += sum(int(b.size) * b.dtype.itemsize for b in biases_p)
    # Fused path only when the (double-buffered) resident weights leave at
    # least half the VMEM limit for activation tiles; otherwise go per-layer.
    if force_per_layer or (2 * weight_bytes > vmem_limit // 2):
        return _mlp_per_layer(x2d, weights_p, biases_p, sigmoid_output, vmem_limit)
    return _mlp_fused(x2d, weights_p, biases_p, sigmoid_output,
                      vmem_limit, weight_bytes)


class PallasMLP:
    """JAX/Pallas re-implementation of the PyTorch MLP module."""

    def __init__(self, input_dim, hidden_dim, output_dim, num_layers,
                 sigmoid_output=False, key=None, dtype=jnp.float32):
        self.num_layers = num_layers
        self.sigmoid_output = sigmoid_output
        self.output_dim = output_dim
        if key is None:
            key = jax.random.PRNGKey(0)
        h = [hidden_dim] * (num_layers - 1)
        dims_in = [input_dim] + h
        dims_out = h + [output_dim]

        self.weights = []     # PyTorch layout (F_out, F_in) — reference / interop
        self.biases = []
        self.weights_p = []   # transposed + zero-padded (K_pad, N_pad) — kernel
        self.biases_p = []    # zero-padded (N_pad,)
        prev_pad = input_dim  # first layer's K stays unpadded (matches x)
        for n, k in zip(dims_in, dims_out):
            key, wk, bk = jax.random.split(key, 3)
            # deterministic init mimicking nn.Linear's uniform(-1/sqrt(n), 1/sqrt(n))
            bound = 1.0 / (n ** 0.5)
            w = jax.random.uniform(wk, (k, n), dtype=dtype, minval=-bound, maxval=bound)
            b = jax.random.uniform(bk, (k,), dtype=dtype, minval=-bound, maxval=bound)
            self.weights.append(w)
            self.biases.append(b)

            # zero-pad N (and carry the padded K from the previous layer) to a
            # lane multiple so stores are unmasked and the MXU is well filled.
            # TODO(synk): on v7x, rounding very wide layers to 256 instead of
            # 128 fills the 2x256 MXU per pass; 128 is kept for portability.
            n_pad = _round_up(k, LANE)
            wt_p = jnp.zeros((prev_pad, n_pad), dtype=dtype)
            wt_p = wt_p.at[:n, :k].set(w.T)
            b_p = jnp.zeros((n_pad,), dtype=dtype).at[:k].set(b)
            self.weights_p.append(wt_p)
            self.biases_p.append(b_p)
            prev_pad = n_pad

    def __call__(self, x, force_per_layer=False):
        lead_shape = x.shape[:-1]
        x2d = x.reshape(-1, x.shape[-1])
        y2d = mlp_forward_pallas(x2d, self.weights_p, self.biases_p,
                                 self.sigmoid_output,
                                 force_per_layer=force_per_layer)
        y2d = y2d[:, :self.output_dim]               # drop zero-padded columns
        return y2d.reshape(*lead_shape, self.output_dim)


def _ref_mlp(x, weights, biases, num_layers, sigmoid_output):
    """Pure-JAX reference matching the PyTorch forward."""
    for i, (w, b) in enumerate(zip(weights, biases)):
        x = x @ w.T + b
        if i < num_layers - 1:
            x = jnp.maximum(x, 0.0)
    if sigmoid_output:
        x = jax.nn.sigmoid(x)
    return x


if __name__ == "__main__":
    key = jax.random.PRNGKey(0)
    key, xkey, mkey = jax.random.split(key, 3)

    # Small shapes consistent with the module's forward: x = (batch, seq, input_dim)
    batch, seq = 2, 8
    input_dim, hidden_dim, output_dim, num_layers = 16, 32, 8, 3
    x = jax.random.normal(xkey, (batch, seq, input_dim), dtype=jnp.float32)

    mlp = PallasMLP(input_dim, hidden_dim, output_dim, num_layers,
                    sigmoid_output=True, key=mkey)

    out = jax.block_until_ready(mlp(x))
    ref = _ref_mlp(x, mlp.weights, mlp.biases, num_layers, True)
    assert out.shape == (batch, seq, output_dim), out.shape
    # NOTE: for bf16 params the inter-layer down-cast widens this tolerance.
    assert jnp.allclose(out, ref, atol=1e-4, rtol=1e-4), "fused path mismatch"

    # Also exercise the per-layer fallback (used when resident weights would
    # not fit in VMEM) against the same reference.
    out_fb = jax.block_until_ready(mlp(x, force_per_layer=True))
    assert jnp.allclose(out_fb, ref, atol=1e-4, rtol=1e-4), "fallback mismatch"

    print("KERNEL_OK")
</pallas_src>

<mosaic_0001>
module attributes {stable_mosaic.version = 11 : i64} {
  func.func @_fused_mlp_kernel(%arg0: i32, %arg1: memref<8x16xf32, #tpu.memory_space<vmem>>, %arg2: memref<16x128xf32, #tpu.memory_space<vmem>>, %arg3: memref<1x128xf32, #tpu.memory_space<vmem>>, %arg4: memref<128x128xf32, #tpu.memory_space<vmem>>, %arg5: memref<1x128xf32, #tpu.memory_space<vmem>>, %arg6: memref<128x128xf32, #tpu.memory_space<vmem>>, %arg7: memref<1x128xf32, #tpu.memory_space<vmem>>, %arg8: memref<8x128xf32, #tpu.memory_space<vmem>>) attributes {dimension_semantics = [#tpu.dimension_semantics<parallel>], iteration_bounds = array<i64: 2>, scalar_prefetch = 0 : i64, scratch_operands = 0 : i64, tpu.core_type = #tpu.core_type<tc>, window_params = [{transform_indices = @transform_0, window_bounds = array<i64: 8, 16>}, {pipeline_mode = #tpu.pipeline_mode<synchronous>, transform_indices = @transform_1, window_bounds = array<i64: 16, 128>}, {pipeline_mode = #tpu.pipeline_mode<synchronous>, transform_indices = @transform_2, window_bounds = array<i64: 1, 128>}, {pipeline_mode = #tpu.pipeline_mode<synchronous>, transform_indices = @transform_3, window_bounds = array<i64: 128, 128>}, {pipeline_mode = #tpu.pipeline_mode<synchronous>, transform_indices = @transform_4, window_bounds = array<i64: 1, 128>}, {pipeline_mode = #tpu.pipeline_mode<synchronous>, transform_indices = @transform_5, window_bounds = array<i64: 128, 128>}, {pipeline_mode = #tpu.pipeline_mode<synchronous>, transform_indices = @transform_6, window_bounds = array<i64: 1, 128>}, {transform_indices = @transform_7, window_bounds = array<i64: 8, 128>}]} {
    %c0 = arith.constant 0 : index
    %c0_0 = arith.constant 0 : index
    %0 = vector.load %arg1[%c0, %c0_0] : memref<8x16xf32, #tpu.memory_space<vmem>>, vector<8x16xf32>
    %c0_1 = arith.constant 0 : index
    %c0_2 = arith.constant 0 : index
    %1 = vector.load %arg2[%c0_1, %c0_2] : memref<16x128xf32, #tpu.memory_space<vmem>>, vector<16x128xf32>
    %c0_3 = arith.constant 0 : index
    %c0_4 = arith.constant 0 : index
    %2 = vector.load %arg3[%c0_3, %c0_4] : memref<1x128xf32, #tpu.memory_space<vmem>>, vector<1x128xf32>
    %cst = arith.constant dense<0.000000e+00> : vector<8x128xf32>
    %3 = tpu.matmul %0, %1, %cst {dimension_numbers = #tpu.dot_dimension_numbers<[1], [0], [0], [1], [0, 0, 1, 1], [], []>} : vector<8x16xf32>, vector<16x128xf32>, vector<8x128xf32> -> vector<8x128xf32>
    %4 = vector.broadcast %2 : vector<1x128xf32> to vector<8x128xf32>
    %5 = arith.addf %3, %4 : vector<8x128xf32>
    %cst_5 = arith.constant 0.000000e+00 : f32
    %6 = vector.broadcast %cst_5 : f32 to vector<8x128xf32>
    %7 = arith.maximumf %5, %6 : vector<8x128xf32>
    %c0_6 = arith.constant 0 : index
    %c0_7 = arith.constant 0 : index
    %8 = vector.load %arg4[%c0_6, %c0_7] : memref<128x128xf32, #tpu.memory_space<vmem>>, vector<128x128xf32>
    %c0_8 = arith.constant 0 : index
    %c0_9 = arith.constant 0 : index
    %9 = vector.load %arg5[%c0_8, %c0_9] : memref<1x128xf32, #tpu.memory_space<vmem>>, vector<1x128xf32>
    %cst_10 = arith.constant dense<0.000000e+00> : vector<8x128xf32>
    %10 = tpu.matmul %7, %8, %cst_10 {dimension_numbers = #tpu.dot_dimension_numbers<[1], [0], [0], [1], [0, 0, 1, 1], [], []>} : vector<8x128xf32>, vector<128x128xf32>, vector<8x128xf32> -> vector<8x128xf32>
    %11 = vector.broadcast %9 : vector<1x128xf32> to vector<8x128xf32>
    %12 = arith.addf %10, %11 : vector<8x128xf32>
    %cst_11 = arith.constant 0.000000e+00 : f32
    %13 = vector.broadcast %cst_11 : f32 to vector<8x128xf32>
    %14 = arith.maximumf %12, %13 : vector<8x128xf32>
    %c0_12 = arith.constant 0 : index
    %c0_13 = arith.constant 0 : index
    %15 = vector.load %arg6[%c0_12, %c0_13] : memref<128x128xf32, #tpu.memory_space<vmem>>, vector<128x128xf32>
    %c0_14 = arith.constant 0 : index
    %c0_15 = arith.constant 0 : index
    %16 = vector.load %arg7[%c0_14, %c0_15] : memref<1x128xf32, #tpu.memory_space<vmem>>, vector<1x128xf32>
    %cst_16 = arith.constant dense<0.000000e+00> : vector<8x128xf32>
    %17 = tpu.matmul %14, %15, %cst_16 {dimension_numbers = #tpu.dot_dimension_numbers<[1], [0], [0], [1], [0, 0, 1, 1], [], []>} : vector<8x128xf32>, vector<128x128xf32>, vector<8x128xf32> -> vector<8x128xf32>
    %18 = vector.broadcast %16 : vector<1x128xf32> to vector<8x128xf32>
    %19 = arith.addf %17, %18 : vector<8x128xf32>
    %20 = arith.negf %19 : vector<8x128xf32>
    %21 = math.exp %20 : vector<8x128xf32>
    %cst_17 = arith.constant 1.000000e+00 : f32
    %22 = vector.broadcast %cst_17 : f32 to vector<8x128xf32>
    %23 = arith.addf %22, %21 : vector<8x128xf32>
    %24 = arith.divf %22, %23 : vector<8x128xf32>
    %c0_18 = arith.constant 0 : index
    %c0_19 = arith.constant 0 : index
    %25 = vector.load %arg8[%c0_18, %c0_19] : memref<8x128xf32, #tpu.memory_space<vmem>>, vector<8x128xf32>
    tpu.vector_store %arg8[%c0_18, %c0_19], %24 {strides = array<i32>} : memref<8x128xf32, #tpu.memory_space<vmem>>, vector<8x128xf32>,
    return
  }
  func.func @transform_0(%arg0: i32) -> (i32, i32) {
    %c0_i32 = arith.constant 0 : i32
    %c0_i32_0 = arith.constant 0 : i32
    return %arg0, %c0_i32 : i32, i32
  }
  func.func @transform_1(%arg0: i32) -> (i32, i32) {
    %c0_i32 = arith.constant 0 : i32
    %c0_i32_0 = arith.constant 0 : i32
    %c0_i32_1 = arith.constant 0 : i32
    return %c0_i32, %c0_i32_0 : i32, i32
  }
  func.func @transform_2(%arg0: i32) -> (i32, i32) {
    %c0_i32 = arith.constant 0 : i32
    %c0_i32_0 = arith.constant 0 : i32
    %c0_i32_1 = arith.constant 0 : i32
    return %c0_i32, %c0_i32_0 : i32, i32
  }
  func.func @transform_3(%arg0: i32) -> (i32, i32) {
    %c0_i32 = arith.constant 0 : i32
    %c0_i32_0 = arith.constant 0 : i32
    %c0_i32_1 = arith.constant 0 : i32
    return %c0_i32, %c0_i32_0 : i32, i32
  }
  func.func @transform_4(%arg0: i32) -> (i32, i32) {
    %c0_i32 = arith.constant 0 : i32
    %c0_i32_0 = arith.constant 0 : i32
    %c0_i32_1 = arith.constant 0 : i32
    return %c0_i32, %c0_i32_0 : i32, i32
  }
  func.func @transform_5(%arg0: i32) -> (i32, i32) {
    %c0_i32 = arith.constant 0 : i32
    %c0_i32_0 = arith.constant 0 : i32
    %c0_i32_1 = arith.constant 0 : i32
    return %c0_i32, %c0_i32_0 : i32, i32
  }
  func.func @transform_6(%arg0: i32) -> (i32, i32) {
    %c0_i32 = arith.constant 0 : i32
    %c0_i32_0 = arith.constant 0 : i32
    %c0_i32_1 = arith.constant 0 : i32
    return %c0_i32, %c0_i32_0 : i32, i32
  }
  func.func @transform_7(%arg0: i32) -> (i32, i32) {
    %c0_i32 = arith.constant 0 : i32
    %c0_i32_0 = arith.constant 0 : i32
    return %arg0, %c0_i32 : i32, i32
  }
}

</mosaic_0001>

<llo_original>
// kernel: tpu_custom_call.1
$region0: #{tpu_custom_call.1}
  #allocation0 [shape = 'u32[]', space=smem, size = 0x4, offset = 0x4, fixed_abs, tag = 'smem constant byte address 0x4 - core index']
  #allocation1 [shape = 'u32[144,128]{1,0:T(1,128)}', space=vmem, size = 0x12000, scoped, tag = 'internal scratch']
  %s0 = inlined_call_operand.hbm [shape: f32[16,16], index: 0, kind: input, shape index: {}]
  %s1 = inlined_call_operand.hbm [shape: f32[16,128], index: 1, kind: input, shape index: {}]
  %s2 = inlined_call_operand.vmem [shape: f32[1,128], index: 2, kind: input, shape index: {}]
  %s3 = inlined_call_operand.hbm [shape: f32[128,128], index: 3, kind: input, shape index: {}]
  %s4 = inlined_call_operand.vmem [shape: f32[1,128], index: 4, kind: input, shape index: {}]
  %s5 = inlined_call_operand.hbm [shape: f32[128,128], index: 5, kind: input, shape index: {}]
  %s6 = inlined_call_operand.vmem [shape: f32[1,128], index: 6, kind: input, shape index: {}]
  %s7 = inlined_call_operand.hbm [shape: f32[16,128], index: 7, kind: output, shape index: {}]
  %s8 = sld [smem:[#allocation0]]
  $region77: #{tpu_custom_call.1} parent=0
    _
  %s10 = ssub.s32 1, %s8
  %s11 = scalar_select 0, %s10, %s8
  $region1: #{tpu_custom_call.1} parent=0
    #allocation2 [shape = 'u8[8192]{0}', space=vmem, size = 0x2000, scoped, tag = 'input window, operand 0']
    #allocation3 [shape = 's32[2]{0}', space=sflag, size = 0x8, scoped, tag = 'scoped memory for tpu_custom_call.1']
    #allocation4 [shape = 's32[2]{0}', space=sflag, size = 0x8, scoped, tag = 'scoped memory for tpu_custom_call.1']
    #allocation5 [shape = 'u8[8192]{0}', space=vmem, size = 0x2000, scoped, tag = 'input window, operand 1, single buffered']
    #allocation6 [shape = 's32[1]{0}', space=sflag, size = 0x4, scoped, tag = 'scoped memory for tpu_custom_call.1']
    #allocation7 [shape = 'u8[65536]{0}', space=vmem, size = 0x10000, scoped, tag = 'input window, operand 3, single buffered']
    #allocation8 [shape = 'u8[65536]{0}', space=vmem, size = 0x10000, scoped, tag = 'input window, operand 5, single buffered']
    #allocation9 [shape = 's32[1]{0}', space=sflag, size = 0x4, scoped, tag = 'scoped memory for tpu_custom_call.1']
    #allocation10 [shape = 'u8[8192]{0}', space=vmem, size = 0x2000, scoped, tag = 'output window, operand 0']
    %12 = vsyncpa [#allocation3], 0
    %s13 = scalar_lea.sflag [#allocation3], 1
    %14 = vsyncpa %s13, 0
    %15 = vsyncpa [#allocation6], 0
    %16 = vsyncpa [#allocation9], 0
    %17 = vsyncpa [#allocation4], 0
    %s18 = scalar_lea.sflag [#allocation4], 1
    %19 = vsyncpa %s18, 0
    loop: start=0, step=1, limit=4
    $region2: #{tpu_custom_call.1} parent=1 // loop_pre_header
      _
    $region3: #{tpu_custom_call.1} parent=1 // loop_header
      %s21 = sphi 0, %s25
      %p22 = scmp.ge.s32.totalorder %s21, 4
      %s31 = sphi 0, %s33
      %s34 = sphi 0, %s31
      %s35 = sphi 0, %s34
      %s51 = sphi 0, %s35
      %s55 = sphi 0, %s55
      %s57 = sphi 0, %s55
      %s58 = sphi 0, %s57
      %s72 = sphi 0, %s58
      %s76 = sphi 0, %s76
      %s78 = sphi 0, %s76
      %s79 = sphi 0, %s78
      %s93 = sphi 0, %s79
      %s97 = sphi 0, %s97
      %s99 = sphi 0, %s97
      %s100 = sphi 0, %s99
      %s114 = sphi 0, %s100
      %s118 = sphi 0, %s118
      %s120 = sphi 0, %s118
      %s121 = sphi 0, %s120
      %s135 = sphi 0, %s121
      %s139 = sphi 0, %s139
      %s141 = sphi 0, %s139
      %s142 = sphi 0, %s141
      %s156 = sphi 0, %s142
      %s160 = sphi 0, %s160
      %s162 = sphi 0, %s160
      %s163 = sphi 0, %s162
      %s177 = sphi 0, %s163
      %s183 = sphi 0, %s185
      %s186 = sphi 0, %s183
      %s187 = sphi 0, %s186
      %s203 = sphi 0, %s187
    $region4: #{tpu_custom_call.1} parent=1 // loop_header_branch
      %24 = sbr.rel (%p22) target = $region8
    $region5: #{tpu_custom_call.1} parent=1 // loop_body
      %s26 = ssub.s32 %s21, 1
      %s27 = ssub.s32 %s21, 2
      %s28 = sadd.s32 %s21, 1
      %s29 = ssub.s32 %s21, %s28
      %p30 = scmp.eq.s32.totalorder %s29, 0
      %s32 = sadd.s32 %s31, 1
      %s33 = scalar_select %p30, %s31, %s32
      %p36 = pneg %p30
      %p37 = scmp.eq.s32.totalorder %s21, 1
      %p38 = por %p36, %p37
      %p39 = scmp.ne.s32.totalorder %s31, %s34
      %p40 = scmp.eq.s32.totalorder %s21, 0
      %p41 = por %p39, %p40
      %p42 = scmp.ne.s32.totalorder %s31, %s34
      %p43 = scmp.eq.s32.totalorder %s26, 1
      %p44 = por %p42, %p43
      %p45 = scmp.ne.s32.totalorder %s34, %s35
      %p46 = scmp.eq.s32.totalorder %s26, 0
      %p47 = por %p45, %p46
      %p48 = scmp.ne.s32.totalorder %s34, %s35
      %p49 = scmp.eq.s32.totalorder %s27, 1
      %p50 = por %p48, %p49
      %p52 = scmp.ne.s32.totalorder %s35, %s51
      %p53 = scmp.eq.s32.totalorder %s27, 0
      %p54 = por %p52, %p53
      %s56 = sadd.s32 %s55, 1
      %p59 = scmp.eq.s32.totalorder %s21, 1
      %p60 = scmp.ne.s32.totalorder %s55, %s57
      %p61 = scmp.eq.s32.totalorder %s21, 0
      %p62 = por %p60, %p61
      %p63 = scmp.ne.s32.totalorder %s55, %s57
      %p64 = scmp.eq.s32.totalorder %s26, 1
      %p65 = por %p63, %p64
      %p66 = scmp.ne.s32.totalorder %s57, %s58
      %p67 = scmp.eq.s32.totalorder %s26, 0
      %p68 = por %p66, %p67
      %p69 = scmp.ne.s32.totalorder %s57, %s58
      %p70 = scmp.eq.s32.totalorder %s27, 1
      %p71 = por %p69, %p70
      %p73 = scmp.ne.s32.totalorder %s58, %s72
      %p74 = scmp.eq.s32.totalorder %s27, 0
      %p75 = por %p73, %p74
      %s77 = sadd.s32 %s76, 1
      %p80 = scmp.eq.s32.totalorder %s21, 1
      %p81 = scmp.ne.s32.totalorder %s76, %s78
      %p82 = scmp.eq.s32.totalorder %s21, 0
      %p83 = por %p81, %p82
      %p84 = scmp.ne.s32.totalorder %s76, %s78
      %p85 = scmp.eq.s32.totalorder %s26, 1
      %p86 = por %p84, %p85
      %p87 = scmp.ne.s32.totalorder %s78, %s79
      %p88 = scmp.eq.s32.totalorder %s26, 0
      %p89 = por %p87, %p88
      %p90 = scmp.ne.s32.totalorder %s78, %s79
      %p91 = scmp.eq.s32.totalorder %s27, 1
      %p92 = por %p90, %p91
      %p94 = scmp.ne.s32.totalorder %s79, %s93
      %p95 = scmp.eq.s32.totalorder %s27, 0
      %p96 = por %p94, %p95
      %s98 = sadd.s32 %s97, 1
      %p101 = scmp.eq.s32.totalorder %s21, 1
      %p102 = scmp.ne.s32.totalorder %s97, %s99
      %p103 = scmp.eq.s32.totalorder %s21, 0
      %p104 = por %p102, %p103
      %p105 = scmp.ne.s32.totalorder %s97, %s99
      %p106 = scmp.eq.s32.totalorder %s26, 1
      %p107 = por %p105, %p106
      %p108 = scmp.ne.s32.totalorder %s99, %s100
      %p109 = scmp.eq.s32.totalorder %s26, 0
      %p110 = por %p108, %p109
      %p111 = scmp.ne.s32.totalorder %s99, %s100
      %p112 = scmp.eq.s32.totalorder %s27, 1
      %p113 = por %p111, %p112
      %p115 = scmp.ne.s32.totalorder %s100, %s114
      %p116 = scmp.eq.s32.totalorder %s27, 0
      %p117 = por %p115, %p116
      %s119 = sadd.s32 %s118, 1
      %p122 = scmp.eq.s32.totalorder %s21, 1
      %p123 = scmp.ne.s32.totalorder %s118, %s120
      %p124 = scmp.eq.s32.totalorder %s21, 0
      %p125 = por %p123, %p124
      %p126 = scmp.ne.s32.totalorder %s118, %s120
      %p127 = scmp.eq.s32.totalorder %s26, 1
      %p128 = por %p126, %p127
      %p129 = scmp.ne.s32.totalorder %s120, %s121
      %p130 = scmp.eq.s32.totalorder %s26, 0
      %p131 = por %p129, %p130
      %p132 = scmp.ne.s32.totalorder %s120, %s121
      %p133 = scmp.eq.s32.totalorder %s27, 1
      %p134 = por %p132, %p133
      %p136 = scmp.ne.s32.totalorder %s121, %s135
      %p137 = scmp.eq.s32.totalorder %s27, 0
      %p138 = por %p136, %p137
      %s140 = sadd.s32 %s139, 1
      %p143 = scmp.eq.s32.totalorder %s21, 1
      %p144 = scmp.ne.s32.totalorder %s139, %s141
      %p145 = scmp.eq.s32.totalorder %s21, 0
      %p146 = por %p144, %p145
      %p147 = scmp.ne.s32.totalorder %s139, %s141
      %p148 = scmp.eq.s32.totalorder %s26, 1
      %p149 = por %p147, %p148
      %p150 = scmp.ne.s32.totalorder %s141, %s142
      %p151 = scmp.eq.s32.totalorder %s26, 0
      %p152 = por %p150, %p151
      %p153 = scmp.ne.s32.totalorder %s141, %s142
      %p154 = scmp.eq.s32.totalorder %s27, 1
      %p155 = por %p153, %p154
      %p157 = scmp.ne.s32.totalorder %s142, %s156
      %p158 = scmp.eq.s32.totalorder %s27, 0
      %p159 = por %p157, %p158
      %s161 = sadd.s32 %s160, 1
      %p164 = scmp.eq.s32.totalorder %s21, 1
      %p165 = scmp.ne.s32.totalorder %s160, %s162
      %p166 = scmp.eq.s32.totalorder %s21, 0
      %p167 = por %p165, %p166
      %p168 = scmp.ne.s32.totalorder %s160, %s162
      %p169 = scmp.eq.s32.totalorder %s26, 1
      %p170 = por %p168, %p169
      %p171 = scmp.ne.s32.totalorder %s162, %s163
      %p172 = scmp.eq.s32.totalorder %s26, 0
      %p173 = por %p171, %p172
      %p174 = scmp.ne.s32.totalorder %s162, %s163
      %p175 = scmp.eq.s32.totalorder %s27, 1
      %p176 = por %p174, %p175
      %p178 = scmp.ne.s32.totalorder %s163, %s177
      %p179 = scmp.eq.s32.totalorder %s27, 0
      %p180 = por %p178, %p179
      %s181 = ssub.s32 %s21, %s28
      %p182 = scmp.eq.s32.totalorder %s181, 0
      %s184 = sadd.s32 %s183, 1
      %s185 = scalar_select %p182, %s183, %s184
      %p188 = pneg %p182
      %p189 = scmp.eq.s32.totalorder %s21, 1
      %p190 = por %p188, %p189
      %p191 = scmp.ne.s32.totalorder %s183, %s186
      %p192 = scmp.eq.s32.totalorder %s21, 0
      %p193 = por %p191, %p192
      %p194 = scmp.ne.s32.totalorder %s183, %s186
      %p195 = scmp.eq.s32.totalorder %s26, 1
      %p196 = por %p194, %p195
      %p197 = scmp.ne.s32.totalorder %s186, %s187
      %p198 = scmp.eq.s32.totalorder %s26, 0
      %p199 = por %p197, %p198
      %p200 = scmp.ne.s32.totalorder %s186, %s187
      %p201 = scmp.eq.s32.totalorder %s27, 1
      %p202 = por %p200, %p201
      %p204 = scmp.ne.s32.totalorder %s187, %s203
      %p205 = scmp.eq.s32.totalorder %s27, 0
      %p206 = por %p204, %p205
      %p207 = scmp.le.s32.totalorder 1, %s21
      %p208 = scmp.lt.s32.totalorder %s21, 3
      %p209 = pnand %p207, %p208
      %p210 = pneg %p209
      // Predicated region
      $region9: #{tpu_custom_call.1} parent=5 // pred_check
        _
      $region10: #{tpu_custom_call.1} parent=5 // pred_check_branch
        %212 = sbr.rel (%p209) target = $region12
      $region11: #{tpu_custom_call.1} parent=5 // pred_region
        %s213 = ssub.s32 %s21, 1
        // Predicated region
        $region13: #{tpu_custom_call.1} parent=11 // pred_check
          %p214 = pneg %p68
        $region14: #{tpu_custom_call.1} parent=11 // pred_check_branch
          %216 = sbr.rel (%p214) target = $region16
        $region15: #{tpu_custom_call.1} parent=11 // pred_region
          %s218 = ssub.s32 256, 256
          %219 = vsyncadd [#allocation6], %s218
          %s220 = sshll.u32 [#allocation5], 4
          %s221 = int_to_ptr.vmem [resolvable:$true] %s220
          %226 = dma.hbm_to_vmem [thread:$0]  %s1, 256, %s221, [#allocation6], 128, 128, 8
        $region16: #{tpu_custom_call.1} parent=11 // pred_fallthru
          _
        // Predicated region
        $region17: #{tpu_custom_call.1} parent=11 // pred_check
          %p227 = pneg %p89
        $region18: #{tpu_custom_call.1} parent=11 // pred_check_branch
          %229 = sbr.rel (%p227) target = $region20
        $region19: #{tpu_custom_call.1} parent=11 // pred_region
          _
        $region20: #{tpu_custom_call.1} parent=11 // pred_fallthru
          _
        // Predicated region
        $region21: #{tpu_custom_call.1} parent=11 // pred_check
          %p230 = pneg %p110
        $region22: #{tpu_custom_call.1} parent=11 // pred_check_branch
          %232 = sbr.rel (%p230) target = $region24
        $region23: #{tpu_custom_call.1} parent=11 // pred_region
          %s234 = ssub.s32 2048, 2048
          %235 = vsyncadd [#allocation6], %s234
          %s236 = sshll.u32 [#allocation7], 4
          %s237 = int_to_ptr.vmem [resolvable:$true] %s236
          %242 = dma.hbm_to_vmem [thread:$0]  %s3, 2048, %s237, [#allocation6], 128, 128, 8
        $region24: #{tpu_custom_call.1} parent=11 // pred_fallthru
          _
        // Predicated region
        $region25: #{tpu_custom_call.1} parent=11 // pred_check
          %p243 = pneg %p131
        $region26: #{tpu_custom_call.1} parent=11 // pred_check_branch
          %245 = sbr.rel (%p243) target = $region28
        $region27: #{tpu_custom_call.1} parent=11 // pred_region
          _
        $region28: #{tpu_custom_call.1} parent=11 // pred_fallthru
          _
        // Predicated region
        $region29: #{tpu_custom_call.1} parent=11 // pred_check
          %p246 = pneg %p152
        $region30: #{tpu_custom_call.1} parent=11 // pred_check_branch
          %248 = sbr.rel (%p246) target = $region32
        $region31: #{tpu_custom_call.1} parent=11 // pred_region
          %s250 = ssub.s32 2048, 2048
          %251 = vsyncadd [#allocation9], %s250
          %s252 = sshll.u32 [#allocation8], 4
          %s253 = int_to_ptr.vmem [resolvable:$true] %s252
          %258 = dma.hbm_to_vmem [thread:$0]  %s5, 2048, %s253, [#allocation9], 128, 128, 8
        $region32: #{tpu_custom_call.1} parent=11 // pred_fallthru
          _
        // Predicated region
        $region33: #{tpu_custom_call.1} parent=11 // pred_check
          %p259 = pneg %p173
        $region34: #{tpu_custom_call.1} parent=11 // pred_check_branch
          %261 = sbr.rel (%p259) target = $region36
        $region35: #{tpu_custom_call.1} parent=11 // pred_region
          _
        $region36: #{tpu_custom_call.1} parent=11 // pred_fallthru
          _
      $region12: #{tpu_custom_call.1} parent=5 // pred_fallthru
        _
      %p262 = scmp.lt.s32.totalorder %s21, 2
      // Predicated region
      $region37: #{tpu_custom_call.1} parent=5 // pred_check
        %p263 = pneg %p262
      $region38: #{tpu_custom_call.1} parent=5 // pred_check_branch
        %265 = sbr.rel (%p263) target = $region40
      $region39: #{tpu_custom_call.1} parent=5 // pred_region
        // Predicated region
        $region41: #{tpu_custom_call.1} parent=39 // pred_check
          %p266 = pneg %p41
        $region42: #{tpu_custom_call.1} parent=39 // pred_check_branch
          %268 = sbr.rel (%p266) target = $region44
        $region43: #{tpu_custom_call.1} parent=39 // pred_region
          %s269 = sand.u32 %s31, 1
          %s270 = scalar_lea.sflag [#allocation3], %s269
          %s271 = sand.u32 %s31, 1
          %s272 = smul.addr %s271, 8
          %s273 = scalar_lea.vmem [#allocation2], %s272
          %s275 = ssub.s32 128, 128
          %276 = vsyncadd %s270, %s275
          %s277 = smul.addr %s21, 128
          %s278 = scalar_lea.hbm %s0, %s277
          %s280 = sshll.u32 %s273, 4
          %s281 = int_to_ptr.vmem [resolvable:$true] %s280
          %283 = dma.hbm_to_vmem [thread:$0]  %s278, 128, %s281, %s270
        $region44: #{tpu_custom_call.1} parent=39 // pred_fallthru
          _
      $region40: #{tpu_custom_call.1} parent=5 // pred_fallthru
        _
      %p284 = scmp.le.s32.totalorder 1, %s21
      %p285 = scmp.lt.s32.totalorder %s21, 3
      %p286 = pnand %p284, %p285
      %p287 = pneg %p286
      // Predicated region
      $region45: #{tpu_custom_call.1} parent=5 // pred_check
        _
      $region46: #{tpu_custom_call.1} parent=5 // pred_check_branch
        %289 = sbr.rel (%p286) target = $region48
      $region47: #{tpu_custom_call.1} parent=5 // pred_region
        %s290 = ssub.s32 %s21, 1
        %s291 = sand.u32 %s34, 1
        %s292 = scalar_lea.sflag [#allocation3], %s291
        %s293 = sand.u32 %s34, 1
        %s294 = smul.addr %s293, 8
        %s295 = scalar_lea.vmem [#allocation2], %s294
        // Predicated region
        $region49: #{tpu_custom_call.1} parent=47 // pred_check
          %p296 = pneg %p47
        $region50: #{tpu_custom_call.1} parent=47 // pred_check_branch
          %298 = sbr.rel (%p296) target = $region52
        $region51: #{tpu_custom_call.1} parent=47 // pred_region
          %299 = dma.done %s292, 128
        $region52: #{tpu_custom_call.1} parent=47 // pred_fallthru
          _
        // Predicated region
        $region53: #{tpu_custom_call.1} parent=47 // pred_check
          %p300 = pneg %p68
        $region54: #{tpu_custom_call.1} parent=47 // pred_check_branch
          %302 = sbr.rel (%p300) target = $region56
        $region55: #{tpu_custom_call.1} parent=47 // pred_region
          %303 = dma.done [#allocation6], 256
        $region56: #{tpu_custom_call.1} parent=47 // pred_fallthru
          _
        // Predicated region
        $region57: #{tpu_custom_call.1} parent=47 // pred_check
          %p304 = pneg %p110
        $region58: #{tpu_custom_call.1} parent=47 // pred_check_branch
          %306 = sbr.rel (%p304) target = $region60
        $region59: #{tpu_custom_call.1} parent=47 // pred_region
          %307 = dma.done [#allocation6], 2048
        $region60: #{tpu_custom_call.1} parent=47 // pred_fallthru
          _
        // Predicated region
        $region61: #{tpu_custom_call.1} parent=47 // pred_check
          %p308 = pneg %p152
        $region62: #{tpu_custom_call.1} parent=47 // pred_check_branch
          %310 = sbr.rel (%p308) target = $region64
        $region63: #{tpu_custom_call.1} parent=47 // pred_region
          %311 = dma.done [#allocation9], 2048
        $region64: #{tpu_custom_call.1} parent=47 // pred_fallthru
          _
        %s312 = sand.u32 %s34, 1
        %s313 = scalar_lea.sflag [#allocation3], %s312
        %s314 = sand.u32 %s34, 1
        %s315 = smul.addr %s314, 8
        %s316 = scalar_lea.vmem [#allocation2], %s315
        %p317 = pneg %p47
        %p318 = pneg %p44
        %p319 = pneg %p68
        %p320 = pneg %p65
        %p321 = pneg %p89
        %p322 = pneg %p86
        %p323 = pneg %p110
        %p324 = pneg %p107
        %p325 = pneg %p131
        %p326 = pneg %p128
        %p327 = pneg %p152
        %p328 = pneg %p149
        %p329 = pneg %p173
        %p330 = pneg %p170
        %p331 = pneg %p199
        %p332 = pneg %p196
        %s333 = sand.u32 %s186, 1
        %s334 = scalar_lea.sflag [#allocation4], %s333
        %s335 = sand.u32 %s186, 1
        %s336 = smul.addr %s335, 8
        %s337 = scalar_lea.vmem [#allocation10], %s336
        %v338 = vld [vmem:[%s295] sm:$0xff]
        %v339 = vld [vmem:[#allocation5] sm:$0xff]
        %v340 = vld [vmem:[#allocation5 + $0x8] sm:$0xff]
        %v341 = vld [vmem:[%s2] sm:$0x1]
        %v343 = vlaneseq
        %v344 = vshrl.u32 %v343, 7
        %v345 = vsub.s32 0, %v344
        %v346 = vrot.slane %v341, %v345
        %vm348 = vcmask 130048
        %v350 = vsel %vm348, %v338, 0
        %352 = vmatprep.subr.mxu0 0.0
        %353 = vmatpush1.msra.mxu0 %v339
        %354 = vmatprep.subr.mxu0 0.0
        %355 = vmatpush1.msra.mxu0 %v340
        %356 = vmatprep.subr.mxu0 0.0
        %357 = vmatpush1.msra.mxu0 0.0
        %358 = vmatprep.subr.mxu0 0.0
        %359 = vmatpush1.msra.mxu0 0.0
        %360 = vmatprep.subr.mxu0 0.0
        %361 = vmatpush1.msra.mxu0 0.0
        %362 = vmatprep.subr.mxu0 0.0
        %363 = vmatpush1.msra.mxu0 0.0
        %364 = vmatprep.subr.mxu0 0.0
        %365 = vmatpush1.msra.mxu0 0.0
        %366 = vmatprep.subr.mxu0 0.0
        %367 = vmatpush1.msra.mxu0 0.0
        %368 = vmatprep.subr.mxu0 0.0
        %369 = vmatpush1.msra.mxu0 0.0
        %370 = vmatprep.subr.mxu0 0.0
        %371 = vmatpush1.msra.mxu0 0.0
        %372 = vmatprep.subr.mxu0 0.0
        %373 = vmatpush1.msra.mxu0 0.0
        %374 = vmatprep.subr.mxu0 0.0
        %375 = vmatpush1.msra.mxu0 0.0
        %376 = vmatprep.subr.mxu0 0.0
        %377 = vmatpush1.msra.mxu0 0.0
        %378 = vmatprep.subr.mxu0 0.0
        %379 = vmatpush1.msra.mxu0 0.0
        %380 = vmatprep.subr.mxu0 0.0
        %381 = vmatpush1.msra.mxu0 0.0
        %382 = vmatprep.subr.mxu0 0.0
        %383 = vmatpush1.msra.mxu0 0.0
        %384 = vmatprep.subr.mxu0 0.0
        %385 = vmatpush1.msra.mxu0 0.0
        %386 = vmatprep.subr.mxu0 0.0
        %387 = vmatpush1.msra.mxu0 0.0
        %388 = vmatprep.subr.mxu0 0.0
        %389 = vmatpush1.msra.mxu0 0.0
        %390 = vmatprep.subr.mxu0 0.0
        %391 = vmatpush1.msra.mxu0 0.0
        %392 = vmatprep.subr.mxu0 0.0
        %393 = vmatpush1.msra.mxu0 0.0
        %394 = vmatprep.subr.mxu0 0.0
        %395 = vmatpush1.msra.mxu0 0.0
        %396 = vmatprep.subr.mxu0 0.0
        %397 = vmatpush1.msra.mxu0 0.0
        %398 = vmatprep.subr.mxu0 0.0
        %399 = vmatpush1.msra.mxu0 0.0
        %400 = vmatprep.subr.mxu0 0.0
        %401 = vmatpush1.msra.mxu0 0.0
        %402 = vmatprep.subr.mxu0 0.0
        %403 = vmatpush1.msra.mxu0 0.0
        %404 = vmatprep.subr.mxu0 0.0
        %405 = vmatpush1.msra.mxu0 0.0
        %406 = vmatprep.subr.mxu0 0.0
        %407 = vmatpush1.msra.mxu0 0.0
        %408 = vmatprep.subr.mxu0 0.0
        %409 = vmatpush1.msra.mxu0 0.0
        %410 = vmatprep.subr.mxu0 0.0
        %411 = vmatpush1.msra.mxu0 0.0
        %412 = vmatprep.subr.mxu0 0.0
        %413 = vmatpush1.msra.mxu0 0.0
        %414 = vmatprep.subr.mxu0 0.0
        %415 = vmatpush1.msra.mxu0 0.0
        %416 = vmatprep.mubr.f32.mxu0 0.0
        %417 = vmatmul.mubr.f32.gmra.mrb[0].mxu0 %v350
        %v418 = vpop.f32.mrb[0].mxu0
        %v419 = vadd.f32 %v346, %v418
        %v420 = vpop.f32.mrb[0].mxu0
        %421 = vdwg.mxu0
        %v422 = vmax.f32 %v419, 0.0
        %v423 = vld [vmem:[#allocation7] sm:$0xff]
        %v424 = vld [vmem:[#allocation7 + $0x8] sm:$0xff]
        %v425 = vld [vmem:[#allocation7 + $0x10] sm:$0xff]
        %v426 = vld [vmem:[#allocation7 + $0x18] sm:$0xff]
        %v427 = vld [vmem:[#allocation7 + $0x20] sm:$0xff]
        %v428 = vld [vmem:[#allocation7 + $0x28] sm:$0xff]
        %v429 = vld [vmem:[#allocation7 + $0x30] sm:$0xff]
        %v430 = vld [vmem:[#allocation7 + $0x38] sm:$0xff]
        %v431 = vld [vmem:[#allocation7 + $0x40] sm:$0xff]
        %v432 = vld [vmem:[#allocation7 + $0x48] sm:$0xff]
        %v433 = vld [vmem:[#allocation7 + $0x50] sm:$0xff]
        %v434 = vld [vmem:[#allocation7 + $0x58] sm:$0xff]
        %v435 = vld [vmem:[#allocation7 + $0x60] sm:$0xff]
        %v436 = vld [vmem:[#allocation7 + $0x68] sm:$0xff]
        %v437 = vld [vmem:[#allocation7 + $0x70] sm:$0xff]
        %v438 = vld [vmem:[#allocation7 + $0x78] sm:$0xff]
        %v439 = vld [vmem:[%s4] sm:$0x1]
        %v441 = vlaneseq
        %v442 = vshrl.u32 %v441, 7
        %v443 = vsub.s32 0, %v442
        %v444 = vrot.slane %v439, %v443
        %446 = vmatprep.subr.mxu0 0.0
        %447 = vmatpush1.msra.mxu0 %v423
        %448 = vmatprep.subr.mxu0 0.0
        %449 = vmatpush1.msra.mxu0 %v424
        %450 = vmatprep.subr.mxu0 0.0
        %451 = vmatpush1.msra.mxu0 %v425
        %452 = vmatprep.subr.mxu0 0.0
        %453 = vmatpush1.msra.mxu0 %v426
        %454 = vmatprep.subr.mxu0 0.0
        %455 = vmatpush1.msra.mxu0 %v427
        %456 = vmatprep.subr.mxu0 0.0
        %457 = vmatpush1.msra.mxu0 %v428
        %458 = vmatprep.subr.mxu0 0.0
        %459 = vmatpush1.msra.mxu0 %v429
        %460 = vmatprep.subr.mxu0 0.0
        %461 = vmatpush1.msra.mxu0 %v430
        %462 = vmatprep.subr.mxu0 0.0
        %463 = vmatpush1.msra.mxu0 %v431
        %464 = vmatprep.subr.mxu0 0.0
        %465 = vmatpush1.msra.mxu0 %v432
        %466 = vmatprep.subr.mxu0 0.0
        %467 = vmatpush1.msra.mxu0 %v433
        %468 = vmatprep.subr.mxu0 0.0
        %469 = vmatpush1.msra.mxu0 %v434
        %470 = vmatprep.subr.mxu0 0.0
        %471 = vmatpush1.msra.mxu0 %v435
        %472 = vmatprep.subr.mxu0 0.0
        %473 = vmatpush1.msra.mxu0 %v436
        %474 = vmatprep.subr.mxu0 0.0
        %475 = vmatpush1.msra.mxu0 %v437
        %476 = vmatprep.subr.mxu0 0.0
        %477 = vmatpush1.msra.mxu0 %v438
        %478 = vmatprep.subr.mxu0 0.0
        %479 = vmatpush1.msra.mxu0 0.0
        %480 = vmatprep.subr.mxu0 0.0
        %481 = vmatpush1.msra.mxu0 0.0
        %482 = vmatprep.subr.mxu0 0.0
        %483 = vmatpush1.msra.mxu0 0.0
        %484 = vmatprep.subr.mxu0 0.0
        %485 = vmatpush1.msra.mxu0 0.0
        %486 = vmatprep.subr.mxu0 0.0
        %487 = vmatpush1.msra.mxu0 0.0
        %488 = vmatprep.subr.mxu0 0.0
        %489 = vmatpush1.msra.mxu0 0.0
        %490 = vmatprep.subr.mxu0 0.0
        %491 = vmatpush1.msra.mxu0 0.0
        %492 = vmatprep.subr.mxu0 0.0
        %493 = vmatpush1.msra.mxu0 0.0
        %494 = vmatprep.subr.mxu0 0.0
        %495 = vmatpush1.msra.mxu0 0.0
        %496 = vmatprep.subr.mxu0 0.0
        %497 = vmatpush1.msra.mxu0 0.0
        %498 = vmatprep.subr.mxu0 0.0
        %499 = vmatpush1.msra.mxu0 0.0
        %500 = vmatprep.subr.mxu0 0.0
        %501 = vmatpush1.msra.mxu0 0.0
        %502 = vmatprep.subr.mxu0 0.0
        %503 = vmatpush1.msra.mxu0 0.0
        %504 = vmatprep.subr.mxu0 0.0
        %505 = vmatpush1.msra.mxu0 0.0
        %506 = vmatprep.subr.mxu0 0.0
        %507 = vmatpush1.msra.mxu0 0.0
        %508 = vmatprep.subr.mxu0 0.0
        %509 = vmatpush1.msra.mxu0 0.0
        %510 = vmatprep.mubr.f32.mxu0 0.0
        %511 = vmatmul.mubr.f32.gmra.mrb[0].mxu0 %v422
        %v512 = vpop.f32.mrb[0].mxu0
        %v513 = vadd.f32 %v444, %v512
        %v514 = vpop.f32.mrb[0].mxu0
        %515 = vdwg.mxu0
        %v516 = vmax.f32 %v513, 0.0
        %v517 = vld [vmem:[#allocation8] sm:$0xff]
        %v518 = vld [vmem:[#allocation8 + $0x8] sm:$0xff]
        %v519 = vld [vmem:[#allocation8 + $0x10] sm:$0xff]
        %v520 = vld [vmem:[#allocation8 + $0x18] sm:$0xff]
        %v521 = vld [vmem:[#allocation8 + $0x20] sm:$0xff]
        %v522 = vld [vmem:[#allocation8 + $0x28] sm:$0xff]
        %v523 = vld [vmem:[#allocation8 + $0x30] sm:$0xff]
        %v524 = vld [vmem:[#allocation8 + $0x38] sm:$0xff]
        %v525 = vld [vmem:[#allocation8 + $0x40] sm:$0xff]
        %v526 = vld [vmem:[#allocation8 + $0x48] sm:$0xff]
        %v527 = vld [vmem:[#allocation8 + $0x50] sm:$0xff]
        %v528 = vld [vmem:[#allocation8 + $0x58] sm:$0xff]
        %v529 = vld [vmem:[#allocation8 + $0x60] sm:$0xff]
        %v530 = vld [vmem:[#allocation8 + $0x68] sm:$0xff]
        %v531 = vld [vmem:[#allocation8 + $0x70] sm:$0xff]
        %v532 = vld [vmem:[#allocation8 + $0x78] sm:$0xff]
        %v533 = vld [vmem:[%s6] sm:$0x1]
        %v535 = vlaneseq
        %v536 = vshrl.u32 %v535, 7
        %v537 = vsub.s32 0, %v536
        %v538 = vrot.slane %v533, %v537
        %540 = vmatprep.subr.mxu0 0.0
        %541 = vmatpush1.msra.mxu0 %v517
        %542 = vmatprep.subr.mxu0 0.0
        %543 = vmatpush1.msra.mxu0 %v518
        %544 = vmatprep.subr.mxu0 0.0
        %545 = vmatpush1.msra.mxu0 %v519
        %546 = vmatprep.subr.mxu0 0.0
        %547 = vmatpush1.msra.mxu0 %v520
        %548 = vmatprep.subr.mxu0 0.0
        %549 = vmatpush1.msra.mxu0 %v521
        %550 = vmatprep.subr.mxu0 0.0
        %551 = vmatpush1.msra.mxu0 %v522
        %552 = vmatprep.subr.mxu0 0.0
        %553 = vmatpush1.msra.mxu0 %v523
        %554 = vmatprep.subr.mxu0 0.0
        %555 = vmatpush1.msra.mxu0 %v524
        %556 = vmatprep.subr.mxu0 0.0
        %557 = vmatpush1.msra.mxu0 %v525
        %558 = vmatprep.subr.mxu0 0.0
        %559 = vmatpush1.msra.mxu0 %v526
        %560 = vmatprep.subr.mxu0 0.0
        %561 = vmatpush1.msra.mxu0 %v527
        %562 = vmatprep.subr.mxu0 0.0
        %563 = vmatpush1.msra.mxu0 %v528
        %564 = vmatprep.subr.mxu0 0.0
        %565 = vmatpush1.msra.mxu0 %v529
        %566 = vmatprep.subr.mxu0 0.0
        %567 = vmatpush1.msra.mxu0 %v530
        %568 = vmatprep.subr.mxu0 0.0
        %569 = vmatpush1.msra.mxu0 %v531
        %570 = vmatprep.subr.mxu0 0.0
        %571 = vmatpush1.msra.mxu0 %v532
        %572 = vmatprep.subr.mxu0 0.0
        %573 = vmatpush1.msra.mxu0 0.0
        %574 = vmatprep.subr.mxu0 0.0
        %575 = vmatpush1.msra.mxu0 0.0
        %576 = vmatprep.subr.mxu0 0.0
        %577 = vmatpush1.msra.mxu0 0.0
        %578 = vmatprep.subr.mxu0 0.0
        %579 = vmatpush1.msra.mxu0 0.0
        %580 = vmatprep.subr.mxu0 0.0
        %581 = vmatpush1.msra.mxu0 0.0
        %582 = vmatprep.subr.mxu0 0.0
        %583 = vmatpush1.msra.mxu0 0.0
        %584 = vmatprep.subr.mxu0 0.0
        %585 = vmatpush1.msra.mxu0 0.0
        %586 = vmatprep.subr.mxu0 0.0
        %587 = vmatpush1.msra.mxu0 0.0
        %588 = vmatprep.subr.mxu0 0.0
        %589 = vmatpush1.msra.mxu0 0.0
        %590 = vmatprep.subr.mxu0 0.0
        %591 = vmatpush1.msra.mxu0 0.0
        %592 = vmatprep.subr.mxu0 0.0
        %593 = vmatpush1.msra.mxu0 0.0
        %594 = vmatprep.subr.mxu0 0.0
        %595 = vmatpush1.msra.mxu0 0.0
        %596 = vmatprep.subr.mxu0 0.0
        %597 = vmatpush1.msra.mxu0 0.0
        %598 = vmatprep.subr.mxu0 0.0
        %599 = vmatpush1.msra.mxu0 0.0
        %600 = vmatprep.subr.mxu0 0.0
        %601 = vmatpush1.msra.mxu0 0.0
        %602 = vmatprep.subr.mxu0 0.0
        %603 = vmatpush1.msra.mxu0 0.0
        %604 = vmatprep.mubr.f32.mxu0 0.0
        %605 = vmatmul.mubr.f32.gmra.mrb[0].mxu0 %v516
        %v606 = vpop.f32.mrb[0].mxu0
        %v607 = vadd.f32 %v538, %v606
        %v608 = vpop.f32.mrb[0].mxu0
        %609 = vdwg.mxu0
        %v610 = vxor.u32 %v607, 2147483648
        %v611 = vmul.f32 %v610, 1.442695
        %v612 = vpow.pop %v611
        %v613 = vadd.f32 %v612, 1.0
        %v614 = vrcp.pop %v613
        %v615 = vmul.f32 1.0, %v614
        %616 = vst [vmem:[%s337] sm:$0xff] %v615
        %s617 = sand.u32 %s186, 1
        %s618 = scalar_lea.sflag [#allocation4], %s617
        %s619 = sand.u32 %s186, 1
        %s620 = smul.addr %s619, 8
        %s621 = scalar_lea.vmem [#allocation10], %s620
        // Predicated region
        $region65: #{tpu_custom_call.1} parent=47 // pred_check
          %p622 = pneg %p196
        $region66: #{tpu_custom_call.1} parent=47 // pred_check_branch
          %624 = sbr.rel (%p622) target = $region68
        $region67: #{tpu_custom_call.1} parent=47 // pred_region
          %s626 = ssub.s32 128, 128
          %627 = vsyncadd %s618, %s626
          %s628 = smul.addr %s26, 128
          %s629 = scalar_lea.hbm %s7, %s628
          %s631 = sshll.u32 %s621, 4
          %s632 = int_to_ptr.vmem [resolvable:$true] %s631
          %634 = dma.vmem_to_hbm [thread:$0]  %s632, 128, %s629, %s618
        $region68: #{tpu_custom_call.1} parent=47 // pred_fallthru
          _
      $region48: #{tpu_custom_call.1} parent=5 // pred_fallthru
        _
      %p635 = scmp.le.s32.totalorder 2, %s21
      // Predicated region
      $region69: #{tpu_custom_call.1} parent=5 // pred_check
        %p636 = pneg %p635
      $region70: #{tpu_custom_call.1} parent=5 // pred_check_branch
        %638 = sbr.rel (%p636) target = $region72
      $region71: #{tpu_custom_call.1} parent=5 // pred_region
        %s639 = ssub.s32 %s21, 2
        // Predicated region
        $region73: #{tpu_custom_call.1} parent=71 // pred_check
          %p640 = pneg %p202
        $region74: #{tpu_custom_call.1} parent=71 // pred_check_branch
          %642 = sbr.rel (%p640) target = $region76
        $region75: #{tpu_custom_call.1} parent=71 // pred_region
          %s643 = sand.u32 %s187, 1
          %s644 = scalar_lea.sflag [#allocation4], %s643
          %s645 = sand.u32 %s187, 1
          %s646 = smul.addr %s645, 8
          %s647 = scalar_lea.vmem [#allocation10], %s646
          %648 = dma.done %s644, 128
        $region76: #{tpu_custom_call.1} parent=71 // pred_fallthru
          _
      $region72: #{tpu_custom_call.1} parent=5 // pred_fallthru
        _
    $region6: #{tpu_custom_call.1} parent=1 // loop_footer
      %s25 = sadd.s32 1, %s21
    $region7: #{tpu_custom_call.1} parent=1 // loop_footer_branch
      %20 = sbr.rel target = $region3
    $region8: #{tpu_custom_call.1} parent=1 // loop_exit
      _
    %649 = vsyncpa [#allocation3], 1
    %s650 = scalar_lea.sflag [#allocation3], 1
    %651 = vsyncpa %s650, 1
    %652 = vsyncpa [#allocation6], 1
    %653 = vsyncpa [#allocation9], 1
    %654 = vsyncpa [#allocation4], 1
    %s655 = scalar_lea.sflag [#allocation4], 1
    %656 = vsyncpa %s655, 1

</llo_original>
